<compile_context>
chip_gen: v7x
topology: tpu7x:2x2x1
jax: 0.10.0
libtpu: 0.0.40
codegen_flags: <defaults>
</compile_context>

<pallas_src>
import math

import jax
import jax.numpy as jnp
from jax.experimental import pallas as pl
from jax.experimental.pallas import tpu as pltpu


def _gelu_kernel(x_ref, o_ref):
    # Upcast once to f32: clean single convert on low-precision inputs and
    # matches PyTorch's float opmath numerics.
    x = x_ref[...].astype(jnp.float32)
    c = jnp.float32(math.sqrt(2.0 / math.pi))
    coeff = jnp.float32(0.0044715)
    x_sq = x * x
    # sqrt(2/pi) * (x + 0.0044715*x^3) == sqrt(2/pi) * x * (1 + 0.0044715*x^2)
    inner = c * x * (1.0 + coeff * x_sq)
    y = 0.5 * x * (1.0 + jnp.tanh(inner))
    o_ref[...] = y.astype(o_ref.dtype)


def gelu_ref(x: jax.Array) -> jax.Array:
    """Pure-JAX reference matching the PyTorch forward exactly."""
    return 0.5 * x * (1.0 + jnp.tanh(
        jnp.sqrt(2.0 / jnp.pi) * (x + 0.0044715 * x ** 3)))


def _round_up(a: int, b: int) -> int:
    return ((a + b - 1) // b) * b


def gelu_pallas(x: jax.Array, *, force_pallas: bool = False) -> jax.Array:
    """Elementwise GELU (tanh approx) via Pallas.

    Works for any float shape/dtype by flattening to a lane-dense
    (rows, 1024) slab and tiling rows with a parallel 1-D grid.
    """
    n = x.size
    if n == 0:
        return x

    # Tiny inputs: Pallas per-step + launch overhead dwarfs the work — let
    # XLA's fused elementwise handle it.
    if not force_pallas and n < 16384:
        return gelu_ref(x).astype(x.dtype)

    W = 1024  # lane-dense width: large multiple of 128
    itemsize = jnp.dtype(x.dtype).itemsize
    # minimum sublane multiple for the block's second-to-last dim
    sub = 8 if itemsize >= 4 else (16 if itemsize == 2 else 32)

    # Per-generation VMEM budget (v7x has only 64 MiB/TC vs 128 MiB on
    # v5e/v6e); keep 2x(in)+2x(out) double-buffered blocks well under it.
    try:
        vmem_cap = int(pltpu.get_tpu_info().vmem_capacity_bytes)
    except Exception:
        vmem_cap = 64 * 1024 * 1024  # conservative (v7x) fallback
    per_block_budget = max(vmem_cap // 12, sub * W * itemsize)

    rows_needed = pl.cdiv(n, W)

    # Byte-based tile sizing, rounded to the sublane multiple.
    row_tile = max(sub, (per_block_budget // (W * itemsize)) // sub * sub)
    # Never tile larger than the actual work.
    row_tile = min(row_tile, _round_up(rows_needed, sub))
    # Keep >= 2 grid steps when there is enough work so the "parallel" row
    # axis can be sharded across v7x's two TensorCores.
    if rows_needed > 2 * sub:
        row_tile = min(row_tile, _round_up(pl.cdiv(rows_needed, 2), sub))

    grid_rows = pl.cdiv(rows_needed, row_tile)
    padded_rows = grid_rows * row_tile
    padded_n = padded_rows * W

    flat = x.reshape(-1)
    if padded_n != n:
        flat = jnp.pad(flat, (0, padded_n - n))
    x2d = flat.reshape(padded_rows, W)

    block_bytes = row_tile * W * itemsize
    # Enough for 4 pipelined buffers + headroom, capped below physical VMEM.
    vmem_limit = int(min(max(4 * block_bytes + (2 << 20), 32 << 20),
                         (vmem_cap * 3) // 4))

    out = pl.pallas_call(
        _gelu_kernel,
        out_shape=jax.ShapeDtypeStruct((padded_rows, W), x.dtype),
        grid_spec=pltpu.PrefetchScalarGridSpec(
            num_scalar_prefetch=0,
            grid=(grid_rows,),
            in_specs=[pl.BlockSpec((row_tile, W), lambda i: (i, 0))],
            out_specs=pl.BlockSpec((row_tile, W), lambda i: (i, 0)),
        ),
        compiler_params=pltpu.CompilerParams(
            dimension_semantics=("parallel",),
            vmem_limit_bytes=vmem_limit,
        ),
    )(x2d)

    return out.reshape(-1)[:n].reshape(x.shape)


if __name__ == "__main__":
    key = jax.random.PRNGKey(0)
    k1, k2 = jax.random.split(key)

    # Small shape consistent with an LLM activation: (batch=2, seq=8, hidden=32).
    # Force the Pallas path to exercise the kernel (incl. padding/tail logic).
    x_small = jax.random.normal(k1, (2, 8, 32), dtype=jnp.float32)
    y_small = gelu_pallas(x_small, force_pallas=True)
    jax.block_until_ready(y_small)
    assert y_small.shape == x_small.shape and y_small.dtype == x_small.dtype
    assert jnp.allclose(y_small, gelu_ref(x_small), atol=1e-5, rtol=1e-5)

    # Larger activation: exercises the lane-dense multi-step parallel grid.
    x_big = jax.random.normal(k2, (4, 256, 1024), dtype=jnp.float32)
    y_big = gelu_pallas(x_big)
    jax.block_until_ready(y_big)
    assert y_big.shape == x_big.shape and y_big.dtype == x_big.dtype
    assert jnp.allclose(y_big, gelu_ref(x_big), atol=1e-5, rtol=1e-5)

    print("KERNEL_OK")
</pallas_src>

<mosaic_0001>
module attributes {stable_mosaic.version = 11 : i64} {
  func.func @_gelu_kernel(%arg0: i32, %arg1: memref<8x1024xf32, #tpu.memory_space<vmem>>, %arg2: memref<8x1024xf32, #tpu.memory_space<vmem>>) attributes {dimension_semantics = [#tpu.dimension_semantics<parallel>], iteration_bounds = array<i64: 1>, scalar_prefetch = 0 : i64, scratch_operands = 0 : i64, tpu.core_type = #tpu.core_type<tc>, window_params = [{transform_indices = @transform_0, window_bounds = array<i64: 8, 1024>}, {transform_indices = @transform_1, window_bounds = array<i64: 8, 1024>}]} {
    %c0 = arith.constant 0 : index
    %c0_0 = arith.constant 0 : index
    %0 = vector.load %arg1[%c0, %c0_0] : memref<8x1024xf32, #tpu.memory_space<vmem>>, vector<8x1024xf32>
    %1 = arith.mulf %0, %0 : vector<8x1024xf32>
    %cst = arith.constant 0.797884583 : f32
    %2 = vector.broadcast %cst : f32 to vector<8x1024xf32>
    %3 = arith.mulf %2, %0 : vector<8x1024xf32>
    %cst_1 = arith.constant 4.471500e-03 : f32
    %4 = vector.broadcast %cst_1 : f32 to vector<8x1024xf32>
    %5 = arith.mulf %4, %1 : vector<8x1024xf32>
    %cst_2 = arith.constant 1.000000e+00 : f32
    %6 = vector.broadcast %cst_2 : f32 to vector<8x1024xf32>
    %7 = arith.addf %6, %5 : vector<8x1024xf32>
    %8 = arith.mulf %3, %7 : vector<8x1024xf32>
    %cst_3 = arith.constant 5.000000e-01 : f32
    %9 = vector.broadcast %cst_3 : f32 to vector<8x1024xf32>
    %10 = arith.mulf %9, %0 : vector<8x1024xf32>
    %11 = math.tanh %8 : vector<8x1024xf32>
    %cst_4 = arith.constant 1.000000e+00 : f32
    %12 = vector.broadcast %cst_4 : f32 to vector<8x1024xf32>
    %13 = arith.addf %12, %11 : vector<8x1024xf32>
    %14 = arith.mulf %10, %13 : vector<8x1024xf32>
    %c0_5 = arith.constant 0 : index
    %c0_6 = arith.constant 0 : index
    %15 = vector.load %arg2[%c0_5, %c0_6] : memref<8x1024xf32, #tpu.memory_space<vmem>>, vector<8x1024xf32>
    tpu.vector_store %arg2[%c0_5, %c0_6], %14 {strides = array<i32>} : memref<8x1024xf32, #tpu.memory_space<vmem>>, vector<8x1024xf32>,
    return
  }
  func.func @transform_0(%arg0: i32) -> (i32, i32) {
    %c0_i32 = arith.constant 0 : i32
    %c0_i32_0 = arith.constant 0 : i32
    return %arg0, %c0_i32 : i32, i32
  }
  func.func @transform_1(%arg0: i32) -> (i32, i32) {
    %c0_i32 = arith.constant 0 : i32
    %c0_i32_0 = arith.constant 0 : i32
    return %arg0, %c0_i32 : i32, i32
  }
}

</mosaic_0001>

<llo_original>
// kernel: tpu_custom_call.1
$region0: #{tpu_custom_call.1}
  #allocation0 [shape = 'u32[]', space=smem, size = 0x4, offset = 0x4, fixed_abs, tag = 'smem constant byte address 0x4 - core index']
  #allocation1 [shape = 'u32[144,128]{1,0:T(1,128)}', space=vmem, size = 0x12000, scoped, tag = 'internal scratch']
  %s0 = inlined_call_operand.hbm [shape: f32[8,1024], index: 0, kind: input, shape index: {}]
  %s1 = inlined_call_operand.hbm [shape: f32[8,1024], index: 1, kind: output, shape index: {}]
  %s2 = sld [smem:[#allocation0]]
  $region18: #{tpu_custom_call.1} parent=0
    _
  %s4 = ssub.s32 1, %s2
  %s5 = scalar_select 0, %s4, %s2
  $region1: #{tpu_custom_call.1} parent=0
    #allocation2 [shape = 'u8[32768]{0}', space=vmem, size = 0x8000, scoped, tag = 'input window, operand 0, single buffered']
    #allocation3 [shape = 's32[1]{0}', space=sflag, size = 0x4, scoped, tag = 'scoped memory for tpu_custom_call.1']
    #allocation4 [shape = 's32[1]{0}', space=sflag, size = 0x4, scoped, tag = 'scoped memory for tpu_custom_call.1']
    #allocation5 [shape = 'u8[32768]{0}', space=vmem, size = 0x8000, scoped, tag = 'output window, operand 0, single buffered']
    %6 = vsyncpa [#allocation3], 0
    %7 = vsyncpa [#allocation4], 0
    // Predicated region
    $region2: #{tpu_custom_call.1} parent=1 // pred_check
      _
    $region3: #{tpu_custom_call.1} parent=1 // pred_check_branch
      %9 = sbr.rel (0) target = $region5
    $region4: #{tpu_custom_call.1} parent=1 // pred_region
      %s11 = ssub.s32 1024, 1024
      %12 = vsyncadd [#allocation3], %s11
      %s14 = sshll.u32 [#allocation2], 4
      %s15 = int_to_ptr.vmem [resolvable:$true] %s14
      %17 = dma.hbm_to_vmem [thread:$0]  %s0, 1024, %s15, [#allocation3]
    $region5: #{tpu_custom_call.1} parent=1 // pred_fallthru
      _
    // Predicated region
    $region6: #{tpu_custom_call.1} parent=1 // pred_check
      _
    $region7: #{tpu_custom_call.1} parent=1 // pred_check_branch
      %19 = sbr.rel (0) target = $region9
    $region8: #{tpu_custom_call.1} parent=1 // pred_region
      %20 = dma.done [#allocation3], 1024
    $region9: #{tpu_custom_call.1} parent=1 // pred_fallthru
      _
    %v21 = vld [vmem:[#allocation2] sm:$0xff]
    %v22 = vld [vmem:[#allocation2 + $0x8] sm:$0xff]
    %v23 = vld [vmem:[#allocation2 + $0x10] sm:$0xff]
    %v24 = vld [vmem:[#allocation2 + $0x18] sm:$0xff]
    %v25 = vld [vmem:[#allocation2 + $0x20] sm:$0xff]
    %v26 = vld [vmem:[#allocation2 + $0x28] sm:$0xff]
    %v27 = vld [vmem:[#allocation2 + $0x30] sm:$0xff]
    %v28 = vld [vmem:[#allocation2 + $0x38] sm:$0xff]
    %v29 = vmul.f32 %v21, %v21
    %v30 = vmul.f32 %v22, %v22
    %v31 = vmul.f32 %v23, %v23
    %v32 = vmul.f32 %v24, %v24
    %v33 = vmul.f32 %v25, %v25
    %v34 = vmul.f32 %v26, %v26
    %v35 = vmul.f32 %v27, %v27
    %v36 = vmul.f32 %v28, %v28
    %v37 = vmul.f32 %v21, 0.7978846
    %v38 = vmul.f32 %v22, 0.7978846
    %v39 = vmul.f32 %v23, 0.7978846
    %v40 = vmul.f32 %v24, 0.7978846
    %v41 = vmul.f32 %v25, 0.7978846
    %v42 = vmul.f32 %v26, 0.7978846
    %v43 = vmul.f32 %v27, 0.7978846
    %v44 = vmul.f32 %v28, 0.7978846
    %v45 = vmul.f32 %v29, 0.0044715
    %v46 = vmul.f32 %v30, 0.0044715
    %v47 = vmul.f32 %v31, 0.0044715
    %v48 = vmul.f32 %v32, 0.0044715
    %v49 = vmul.f32 %v33, 0.0044715
    %v50 = vmul.f32 %v34, 0.0044715
    %v51 = vmul.f32 %v35, 0.0044715
    %v52 = vmul.f32 %v36, 0.0044715
    %v53 = vadd.f32 %v45, 1.0
    %v54 = vadd.f32 %v46, 1.0
    %v55 = vadd.f32 %v47, 1.0
    %v56 = vadd.f32 %v48, 1.0
    %v57 = vadd.f32 %v49, 1.0
    %v58 = vadd.f32 %v50, 1.0
    %v59 = vadd.f32 %v51, 1.0
    %v60 = vadd.f32 %v52, 1.0
    %v61 = vmul.f32 %v37, %v53
    %v62 = vmul.f32 %v38, %v54
    %v63 = vmul.f32 %v39, %v55
    %v64 = vmul.f32 %v40, %v56
    %v65 = vmul.f32 %v41, %v57
    %v66 = vmul.f32 %v42, %v58
    %v67 = vmul.f32 %v43, %v59
    %v68 = vmul.f32 %v44, %v60
    %v69 = vmul.f32 %v21, 0.5
    %v70 = vmul.f32 %v22, 0.5
    %v71 = vmul.f32 %v23, 0.5
    %v72 = vmul.f32 %v24, 0.5
    %v73 = vmul.f32 %v25, 0.5
    %v74 = vmul.f32 %v26, 0.5
    %v75 = vmul.f32 %v27, 0.5
    %v76 = vmul.f32 %v28, 0.5
    %v77 = vtanh.pop %v61
    %v78 = vtanh.pop %v62
    %v79 = vtanh.pop %v63
    %v80 = vtanh.pop %v64
    %v81 = vtanh.pop %v65
    %v82 = vtanh.pop %v66
    %v83 = vtanh.pop %v67
    %v84 = vtanh.pop %v68
    %v85 = vadd.f32 %v77, 1.0
    %v86 = vadd.f32 %v78, 1.0
    %v87 = vadd.f32 %v79, 1.0
    %v88 = vadd.f32 %v80, 1.0
    %v89 = vadd.f32 %v81, 1.0
    %v90 = vadd.f32 %v82, 1.0
    %v91 = vadd.f32 %v83, 1.0
    %v92 = vadd.f32 %v84, 1.0
    %v93 = vmul.f32 %v69, %v85
    %v94 = vmul.f32 %v70, %v86
    %v95 = vmul.f32 %v71, %v87
    %v96 = vmul.f32 %v72, %v88
    %v97 = vmul.f32 %v73, %v89
    %v98 = vmul.f32 %v74, %v90
    %v99 = vmul.f32 %v75, %v91
    %v100 = vmul.f32 %v76, %v92
    %101 = vst [vmem:[#allocation5] sm:$0xff] %v93
    %102 = vst [vmem:[#allocation5 + $0x8] sm:$0xff] %v94
    %103 = vst [vmem:[#allocation5 + $0x10] sm:$0xff] %v95
    %104 = vst [vmem:[#allocation5 + $0x18] sm:$0xff] %v96
    %105 = vst [vmem:[#allocation5 + $0x20] sm:$0xff] %v97
    %106 = vst [vmem:[#allocation5 + $0x28] sm:$0xff] %v98
    %107 = vst [vmem:[#allocation5 + $0x30] sm:$0xff] %v99
    %108 = vst [vmem:[#allocation5 + $0x38] sm:$0xff] %v100
    // Predicated region
    $region10: #{tpu_custom_call.1} parent=1 // pred_check
      _
    $region11: #{tpu_custom_call.1} parent=1 // pred_check_branch
      %110 = sbr.rel (0) target = $region13
    $region12: #{tpu_custom_call.1} parent=1 // pred_region
      %s112 = ssub.s32 1024, 1024
      %113 = vsyncadd [#allocation4], %s112
      %s115 = sshll.u32 [#allocation5], 4
      %s116 = int_to_ptr.vmem [resolvable:$true] %s115
      %118 = dma.vmem_to_hbm [thread:$0]  %s116, 1024, %s1, [#allocation4]
    $region13: #{tpu_custom_call.1} parent=1 // pred_fallthru
      _
    // Predicated region
    $region14: #{tpu_custom_call.1} parent=1 // pred_check
      _
    $region15: #{tpu_custom_call.1} parent=1 // pred_check_branch
      %120 = sbr.rel (0) target = $region17
    $region16: #{tpu_custom_call.1} parent=1 // pred_region
      %121 = dma.done [#allocation4], 1024
    $region17: #{tpu_custom_call.1} parent=1 // pred_fallthru
      _
    %122 = vsyncpa [#allocation3], 1
    %123 = vsyncpa [#allocation4], 1

</llo_original>
